<compile_context>
chip_gen: v5e
topology: v5e:2x2
jax: 0.10.0
libtpu: 0.0.40
codegen_flags: <defaults>
</compile_context>

<pallas_src>
import functools

import jax
import jax.numpy as jnp
from jax.experimental import pallas as pl
from jax.experimental.pallas import tpu as pltpu

_LANES = 128


def _simse_partial_kernel(pred_ref, real_ref, out_ref, *, tm, rows,
                          blocks_per_split, needs_mask):
    c = pl.program_id(0)   # core-split index ("parallel")
    i = pl.program_id(1)   # streaming / reduction index ("arbitrary")

    # Initialize this split's resident partial-sum block once.
    @pl.when(i == 0)
    def _():
        out_ref[...] = jnp.zeros_like(out_ref)

    # Cast in-kernel: bf16 inputs stream at native width; upcast-then-subtract
    # is also the right path on v5e (no bf16 VALU).
    diff = real_ref[...].astype(jnp.float32) - pred_ref[...].astype(jnp.float32)

    if needs_mask:
        # Zero rows beyond the logical end of the stream (partial last tile
        # and fully-out-of-range clamped steps of the second core split).
        row_start = (c * blocks_per_split + i) * tm
        row_ids = row_start + jax.lax.broadcasted_iota(jnp.int32, (tm, _LANES), 0)
        diff = jnp.where(row_ids < rows, diff, 0.0)

    if tm % 8 == 0:
        # Fold the (tm,128) tile onto the vreg-shaped accumulator using
        # elementwise VPU adds only (hidden under the HBM DMA).
        out_ref[...] += diff.reshape(tm // 8, 8, _LANES).sum(axis=0)
    else:
        # Tiny / irregular input (rows < 8 or not a multiple of 8): a single
        # reduce is fine, performance is irrelevant here.
        out_ref[0, 0] += jnp.sum(diff)


def simse(pred, real, *, tm=2048, num_core_splits=2):
    """Pallas TPU implementation of SIMSE.forward(pred, real)."""
    assert pred.shape == real.shape, "pred and real must have the same shape"
    n = pred.size  # torch.numel(diffs)
    assert n > 0, "SIMSE of an empty tensor is undefined"

    p = jnp.ravel(pred)   # contiguous flatten: metadata only, no copy
    r = jnp.ravel(real)

    rows = pl.cdiv(n, _LANES)
    padded = rows * _LANES
    if padded != n:
        # Rare path: numel not a multiple of 128; pad the <128 missing lane
        # elements with zeros (they contribute 0 to sum(real - pred)).
        # TODO(synk): a manual-DMA tail would avoid this copy entirely.
        p = jnp.pad(p, (0, padded - n))
        r = jnp.pad(r, (0, padded - n))
    p2 = p.reshape(rows, _LANES)
    r2 = r.reshape(rows, _LANES)

    # Sublane packing multiple per dtype (8 for 32-bit, 16 for bf16, 32 for 8-bit).
    def _pack(dt):
        return 8 * max(1, 4 // jnp.dtype(dt).itemsize)
    pack = max(_pack(p2.dtype), _pack(r2.dtype))

    if rows <= tm:
        tm_eff = rows                          # full second-to-last dim: always legal
    else:
        tm_eff = max(pack, (tm // pack) * pack)

    blocks_total = pl.cdiv(rows, tm_eff)
    splits = max(1, int(num_core_splits))
    blocks_per_split = pl.cdiv(blocks_total, splits)
    needs_mask = (splits * blocks_per_split * tm_eff) != rows
    last_block = blocks_total - 1

    def in_map(c, i):
        # Clamp fully-out-of-range steps; their contribution is masked to zero.
        return (jnp.minimum(c * blocks_per_split + i, last_block), 0)

    kernel = functools.partial(
        _simse_partial_kernel, tm=tm_eff, rows=rows,
        blocks_per_split=blocks_per_split, needs_mask=needs_mask)

    # VMEM budget: 2 inputs x 2 pipeline buffers x block, plus room for the
    # f32 intermediates and the (8,128) output blocks.
    block_bytes = tm_eff * _LANES * max(p2.dtype.itemsize, r2.dtype.itemsize)
    vmem_need = 4 * block_bytes + 4 * tm_eff * _LANES * 4 + 2 * 8 * _LANES * 4 + (2 << 20)
    cp_kwargs = dict(dimension_semantics=("parallel", "arbitrary"))
    if vmem_need > (12 << 20):
        # Only needed if tm is pushed past the default scoped VMEM limits
        # (16 MiB on v5e, 32 MiB on v6e/v7x).
        cp_kwargs["vmem_limit_bytes"] = int(vmem_need)

    partial_sums = pl.pallas_call(
        kernel,
        out_shape=jax.ShapeDtypeStruct((splits * 8, _LANES), jnp.float32),
        grid_spec=pltpu.PrefetchScalarGridSpec(
            num_scalar_prefetch=0,
            grid=(splits, blocks_per_split),
            in_specs=[
                pl.BlockSpec((tm_eff, _LANES), in_map),
                pl.BlockSpec((tm_eff, _LANES), in_map),
            ],
            out_specs=pl.BlockSpec((8, _LANES), lambda c, i: (c, 0)),
        ),
        compiler_params=pltpu.CompilerParams(**cp_kwargs),
    )(p2, r2)

    s = jnp.sum(partial_sums)
    return (s * s) * jnp.float32(1.0 / (float(n) ** 2))


if __name__ == "__main__":
    key = jax.random.PRNGKey(0)
    k1, k2, k3, k4 = jax.random.split(key, 4)

    # Small NCHW-shaped example inputs (SIMSE itself is shape-agnostic).
    pred = jax.random.normal(k1, (2, 4, 16, 16), dtype=jnp.float32)
    real = jax.random.normal(k2, (2, 4, 16, 16), dtype=jnp.float32)

    result = jax.block_until_ready(simse(pred, real))
    n = pred.size
    ref = jnp.sum(real - pred) ** 2 / (n ** 2)
    assert jnp.allclose(result, ref, rtol=1e-5, atol=1e-6), (result, ref)

    # Ragged numel (not a multiple of 128) exercises the mask / pad path.
    pred_r = jax.random.normal(k3, (3, 5, 7, 11), dtype=jnp.float32)
    real_r = jax.random.normal(k4, (3, 5, 7, 11), dtype=jnp.float32)
    result_r = jax.block_until_ready(simse(pred_r, real_r))
    n_r = pred_r.size
    ref_r = jnp.sum(real_r - pred_r) ** 2 / (n_r ** 2)
    assert jnp.allclose(result_r, ref_r, rtol=1e-5, atol=1e-6), (result_r, ref_r)

    # bf16 inputs stream at native width; the cast to f32 happens in-kernel.
    pred_b = pred.astype(jnp.bfloat16)
    real_b = real.astype(jnp.bfloat16)
    result_b = jax.block_until_ready(simse(pred_b, real_b))
    ref_b = jnp.sum(real_b.astype(jnp.float32)
                    - pred_b.astype(jnp.float32)) ** 2 / (n ** 2)
    assert jnp.allclose(result_b, ref_b, rtol=5e-3, atol=1e-5), (result_b, ref_b)

    print("KERNEL_OK")
</pallas_src>

<mosaic_0001>
module attributes {stable_mosaic.version = 11 : i64} {
  func.func @_simse_partial_kernel(%arg0: i32, %arg1: i32, %arg2: memref<16x128xf32, #tpu.memory_space<vmem>>, %arg3: memref<16x128xf32, #tpu.memory_space<vmem>>, %arg4: memref<8x128xf32, #tpu.memory_space<vmem>>) attributes {dimension_semantics = [#tpu.dimension_semantics<parallel>, #tpu.dimension_semantics<arbitrary>], iteration_bounds = array<i64: 2, 1>, scalar_prefetch = 0 : i64, scratch_operands = 0 : i64, tpu.core_type = #tpu.core_type<tc>, window_params = [{transform_indices = @transform_0, window_bounds = array<i64: 16, 128>}, {transform_indices = @transform_1, window_bounds = array<i64: 16, 128>}, {transform_indices = @transform_2, window_bounds = array<i64: 8, 128>}]} {
    %c0_i32 = arith.constant 0 : i32
    %0 = arith.cmpi eq, %arg1, %c0_i32 : i32
    %1 = arith.extui %0 : i1 to i32
    %c0_i32_0 = arith.constant 0 : i32
    %2 = arith.cmpi ne, %1, %c0_i32_0 : i32
    scf.if %2 {
      %cst_10 = arith.constant 0.000000e+00 : f32
      %21 = vector.broadcast %cst_10 : f32 to vector<8x128xf32>
      %c0_11 = arith.constant 0 : index
      %c0_12 = arith.constant 0 : index
      %22 = vector.load %arg4[%c0_11, %c0_12] : memref<8x128xf32, #tpu.memory_space<vmem>>, vector<8x128xf32>
      tpu.vector_store %arg4[%c0_11, %c0_12], %21 {strides = array<i32>} : memref<8x128xf32, #tpu.memory_space<vmem>>, vector<8x128xf32>,
    } else {
    }
    %c0 = arith.constant 0 : index
    %c0_1 = arith.constant 0 : index
    %3 = vector.load %arg3[%c0, %c0_1] : memref<16x128xf32, #tpu.memory_space<vmem>>, vector<16x128xf32>
    %c0_2 = arith.constant 0 : index
    %c0_3 = arith.constant 0 : index
    %4 = vector.load %arg2[%c0_2, %c0_3] : memref<16x128xf32, #tpu.memory_space<vmem>>, vector<16x128xf32>
    %5 = arith.subf %3, %4 : vector<16x128xf32>
    %c1_i32 = arith.constant 1 : i32
    %6 = arith.muli %arg0, %c1_i32 : i32
    %7 = arith.addi %6, %arg1 : i32
    %c16_i32 = arith.constant 16 : i32
    %8 = arith.muli %7, %c16_i32 : i32
    %9 = tpu.iota {dimensions = array<i32: 0>} : vector<16x128xi32>
    %10 = vector.broadcast %8 : i32 to vector<16x128xi32>
    %11 = arith.addi %10, %9 : vector<16x128xi32>
    %c16_i32_4 = arith.constant 16 : i32
    %12 = vector.broadcast %c16_i32_4 : i32 to vector<16x128xi32>
    %13 = arith.cmpi slt, %11, %12 : vector<16x128xi32>
    %cst = arith.constant 0.000000e+00 : f32
    %14 = vector.broadcast %cst : f32 to vector<16x128xf32>
    %15 = arith.select %13, %5, %14 : vector<16x128xi1>, vector<16x128xf32>
    %c0_5 = arith.constant 0 : index
    %c0_6 = arith.constant 0 : index
    %16 = vector.load %arg4[%c0_5, %c0_6] : memref<8x128xf32, #tpu.memory_space<vmem>>, vector<8x128xf32>
    %17 = vector.shape_cast %15 : vector<16x128xf32> to vector<2x8x128xf32>
    %cst_7 = arith.constant dense<0.000000e+00> : vector<8x128xf32>
    %18 = vector.multi_reduction <add>, %17, %cst_7 [0] : vector<2x8x128xf32> to vector<8x128xf32>
    %19 = arith.addf %16, %18 : vector<8x128xf32>
    %c0_8 = arith.constant 0 : index
    %c0_9 = arith.constant 0 : index
    %20 = vector.load %arg4[%c0_8, %c0_9] : memref<8x128xf32, #tpu.memory_space<vmem>>, vector<8x128xf32>
    tpu.vector_store %arg4[%c0_8, %c0_9], %19 {strides = array<i32>} : memref<8x128xf32, #tpu.memory_space<vmem>>, vector<8x128xf32>,
    return
  }
  func.func @transform_0(%arg0: i32, %arg1: i32) -> (i32, i32) {
    %c1_i32 = arith.constant 1 : i32
    %0 = arith.muli %arg0, %c1_i32 : i32
    %1 = arith.addi %0, %arg1 : i32
    %c0_i32 = arith.constant 0 : i32
    %2 = arith.minsi %1, %c0_i32 : i32
    %c0_i32_0 = arith.constant 0 : i32
    %c0_i32_1 = arith.constant 0 : i32
    return %2, %c0_i32_0 : i32, i32
  }
  func.func @transform_1(%arg0: i32, %arg1: i32) -> (i32, i32) {
    %c1_i32 = arith.constant 1 : i32
    %0 = arith.muli %arg0, %c1_i32 : i32
    %1 = arith.addi %0, %arg1 : i32
    %c0_i32 = arith.constant 0 : i32
    %2 = arith.minsi %1, %c0_i32 : i32
    %c0_i32_0 = arith.constant 0 : i32
    %c0_i32_1 = arith.constant 0 : i32
    return %2, %c0_i32_0 : i32, i32
  }
  func.func @transform_2(%arg0: i32, %arg1: i32) -> (i32, i32) {
    %c0_i32 = arith.constant 0 : i32
    %c0_i32_0 = arith.constant 0 : i32
    return %arg0, %c0_i32 : i32, i32
  }
}

</mosaic_0001>

<llo_original>
// kernel: tpu_custom_call.1
$region0: #{tpu_custom_call.1}
  #allocation0 [shape = 'u32[]', space=smem, size = 0x4, offset = 0x4, fixed_abs, tag = 'smem constant byte address 0x4 - core index']
  #allocation1 [shape = 'u32[72,128]{1,0:T(1,128)}', space=vmem, size = 0x9000, scoped, tag = 'internal scratch']
  %s0 = inlined_call_operand.hbm [shape: f32[16,128], index: 0, kind: input, shape index: {}]
  %s1 = inlined_call_operand.hbm [shape: f32[16,128], index: 1, kind: input, shape index: {}]
  %s2 = inlined_call_operand.hbm [shape: f32[16,128], index: 2, kind: output, shape index: {}]
  %s3 = sld [smem:[#allocation0]]
  $region53: #{tpu_custom_call.1} parent=0
    _
  %s5 = ssub.s32 1, %s3
  %s6 = scalar_select 0, %s5, %s3
  $region1: #{tpu_custom_call.1} parent=0
    #allocation2 [shape = 'u8[16384]{0}', space=vmem, size = 0x4000, scoped, tag = 'input window, operand 0']
    #allocation3 [shape = 's32[2]{0}', space=sflag, size = 0x8, scoped, tag = 'scoped memory for tpu_custom_call.1']
    #allocation4 [shape = 's32[2]{0}', space=sflag, size = 0x8, scoped, tag = 'scoped memory for tpu_custom_call.1']
    #allocation5 [shape = 'u8[16384]{0}', space=vmem, size = 0x4000, scoped, tag = 'input window, operand 1']
    #allocation6 [shape = 's32[2]{0}', space=sflag, size = 0x8, scoped, tag = 'scoped memory for tpu_custom_call.1']
    #allocation7 [shape = 'u8[8192]{0}', space=vmem, size = 0x2000, scoped, tag = 'output window, operand 0']
    %7 = vsyncpa [#allocation3], 0
    %s8 = scalar_lea.sflag [#allocation3], 1
    %9 = vsyncpa %s8, 0
    %10 = vsyncpa [#allocation6], 0
    %s11 = scalar_lea.sflag [#allocation6], 1
    %12 = vsyncpa %s11, 0
    %13 = vsyncpa [#allocation4], 0
    %s14 = scalar_lea.sflag [#allocation4], 1
    %15 = vsyncpa %s14, 0
    loop: start=0, step=1, limit=4
    $region2: #{tpu_custom_call.1} parent=1 // loop_pre_header
      _
    $region3: #{tpu_custom_call.1} parent=1 // loop_header
      %s17 = sphi 0, %s21
      %p18 = scmp.ge.s32.totalorder %s17, 4
      %s24 = sphi 0, %s36
      %s25 = sphi 0, %s32
      %s26 = sphi 0, %s24
      %s27 = sphi 0, %s25
      %s28 = sphi 0, %s26
      %s29 = sphi 0, %s27
      %s45 = sphi 0, %s47
      %s48 = sphi 0, %s45
      %s49 = sphi 0, %s48
      %s65 = sphi 0, %s49
      %s77 = sphi 0, %s79
      %s80 = sphi 0, %s77
      %s81 = sphi 0, %s80
      %s97 = sphi 0, %s81
      %s103 = sphi 0, %s105
      %s106 = sphi 0, %s103
      %s107 = sphi 0, %s106
      %s123 = sphi 0, %s107
    $region4: #{tpu_custom_call.1} parent=1 // loop_header_branch
      %20 = sbr.rel (%p18) target = $region8
    $region5: #{tpu_custom_call.1} parent=1 // loop_body
      %s22 = ssub.s32 %s17, 1
      %s23 = ssub.s32 %s17, 2
      %s30 = sadd.s32 1, %s25
      %p31 = scmp.ge.s32.totalorder %s30, 1
      %s32 = scalar_select %p31, 0, %s30
      %s33 = sadd.s32 1, %s24
      %s34 = scalar_select %p31, %s33, %s24
      %p35 = scmp.ge.s32.totalorder %s34, 2
      %s36 = scalar_select %p35, 0, %s34
      %s37 = sadd.s32 %s24, %s25
      %p38 = scmp.lt.s32.totalorder %s37, 0
      %s39 = scalar_select %p38, %s37, 0
      %s40 = sadd.s32 %s36, %s32
      %p41 = scmp.lt.s32.totalorder %s40, 0
      %s42 = scalar_select %p41, %s40, 0
      %s43 = ssub.s32 %s39, %s42
      %p44 = scmp.eq.s32.totalorder %s43, 0
      %s46 = sadd.s32 %s45, 1
      %s47 = scalar_select %p44, %s45, %s46
      %p50 = pneg %p44
      %p51 = scmp.eq.s32.totalorder %s17, 1
      %p52 = por %p50, %p51
      %p53 = scmp.ne.s32.totalorder %s45, %s48
      %p54 = scmp.eq.s32.totalorder %s17, 0
      %p55 = por %p53, %p54
      %p56 = scmp.ne.s32.totalorder %s45, %s48
      %p57 = scmp.eq.s32.totalorder %s22, 1
      %p58 = por %p56, %p57
      %p59 = scmp.ne.s32.totalorder %s48, %s49
      %p60 = scmp.eq.s32.totalorder %s22, 0
      %p61 = por %p59, %p60
      %p62 = scmp.ne.s32.totalorder %s48, %s49
      %p63 = scmp.eq.s32.totalorder %s23, 1
      %p64 = por %p62, %p63
      %p66 = scmp.ne.s32.totalorder %s49, %s65
      %p67 = scmp.eq.s32.totalorder %s23, 0
      %p68 = por %p66, %p67
      %s69 = sadd.s32 %s24, %s25
      %p70 = scmp.lt.s32.totalorder %s69, 0
      %s71 = scalar_select %p70, %s69, 0
      %s72 = sadd.s32 %s36, %s32
      %p73 = scmp.lt.s32.totalorder %s72, 0
      %s74 = scalar_select %p73, %s72, 0
      %s75 = ssub.s32 %s71, %s74
      %p76 = scmp.eq.s32.totalorder %s75, 0
      %s78 = sadd.s32 %s77, 1
      %s79 = scalar_select %p76, %s77, %s78
      %p82 = pneg %p76
      %p83 = scmp.eq.s32.totalorder %s17, 1
      %p84 = por %p82, %p83
      %p85 = scmp.ne.s32.totalorder %s77, %s80
      %p86 = scmp.eq.s32.totalorder %s17, 0
      %p87 = por %p85, %p86
      %p88 = scmp.ne.s32.totalorder %s77, %s80
      %p89 = scmp.eq.s32.totalorder %s22, 1
      %p90 = por %p88, %p89
      %p91 = scmp.ne.s32.totalorder %s80, %s81
      %p92 = scmp.eq.s32.totalorder %s22, 0
      %p93 = por %p91, %p92
      %p94 = scmp.ne.s32.totalorder %s80, %s81
      %p95 = scmp.eq.s32.totalorder %s23, 1
      %p96 = por %p94, %p95
      %p98 = scmp.ne.s32.totalorder %s81, %s97
      %p99 = scmp.eq.s32.totalorder %s23, 0
      %p100 = por %p98, %p99
      %s101 = ssub.s32 %s24, %s36
      %p102 = scmp.eq.s32.totalorder %s101, 0
      %s104 = sadd.s32 %s103, 1
      %s105 = scalar_select %p102, %s103, %s104
      %p108 = pneg %p102
      %p109 = scmp.eq.s32.totalorder %s17, 1
      %p110 = por %p108, %p109
      %p111 = scmp.ne.s32.totalorder %s103, %s106
      %p112 = scmp.eq.s32.totalorder %s17, 0
      %p113 = por %p111, %p112
      %p114 = scmp.ne.s32.totalorder %s103, %s106
      %p115 = scmp.eq.s32.totalorder %s22, 1
      %p116 = por %p114, %p115
      %p117 = scmp.ne.s32.totalorder %s106, %s107
      %p118 = scmp.eq.s32.totalorder %s22, 0
      %p119 = por %p117, %p118
      %p120 = scmp.ne.s32.totalorder %s106, %s107
      %p121 = scmp.eq.s32.totalorder %s23, 1
      %p122 = por %p120, %p121
      %p124 = scmp.ne.s32.totalorder %s107, %s123
      %p125 = scmp.eq.s32.totalorder %s23, 0
      %p126 = por %p124, %p125
      %p127 = scmp.le.s32.totalorder 1, %s17
      %p128 = scmp.lt.s32.totalorder %s17, 3
      %p129 = pnand %p127, %p128
      %p130 = pneg %p129
      // Predicated region
      $region9: #{tpu_custom_call.1} parent=5 // pred_check
        _
      $region10: #{tpu_custom_call.1} parent=5 // pred_check_branch
        %132 = sbr.rel (%p129) target = $region12
      $region11: #{tpu_custom_call.1} parent=5 // pred_region
        %s133 = ssub.s32 %s17, 1
      $region12: #{tpu_custom_call.1} parent=5 // pred_fallthru
        _
      %p134 = scmp.lt.s32.totalorder %s17, 2
      // Predicated region
      $region13: #{tpu_custom_call.1} parent=5 // pred_check
        %p135 = pneg %p134
      $region14: #{tpu_custom_call.1} parent=5 // pred_check_branch
        %137 = sbr.rel (%p135) target = $region16
      $region15: #{tpu_custom_call.1} parent=5 // pred_region
        // Predicated region
        $region17: #{tpu_custom_call.1} parent=15 // pred_check
          %p138 = pneg %p55
        $region18: #{tpu_custom_call.1} parent=15 // pred_check_branch
          %140 = sbr.rel (%p138) target = $region20
        $region19: #{tpu_custom_call.1} parent=15 // pred_region
          %s141 = sand.u32 %s45, 1
          %s142 = scalar_lea.sflag [#allocation3], %s141
          %s143 = sand.u32 %s45, 1
          %s144 = smul.addr %s143, 16
          %s145 = scalar_lea.vmem [#allocation2], %s144
          %s146 = sadd.s32 %s24, %s25
          %p147 = scmp.lt.s32.totalorder %s146, 0
          %s148 = scalar_select %p147, %s146, 0
          %s149 = smul.u32 2, %s148
          %151 = vsyncadd %s142, 0
          %s152 = smul.addr %s149, 8
          %s153 = scalar_lea.hbm %s0, %s152
          %s154 = sshll.u32 %s153, 4
          %s155 = int_to_ptr.hbm [resolvable:$true] %s154
          %s156 = sshll.u32 %s145, 4
          %s157 = int_to_ptr.vmem [resolvable:$true] %s156
          %162 = dma.hbm_to_vmem [thread:$0]  %s155, 256, %s157, %s142, 128, 128, 8
        $region20: #{tpu_custom_call.1} parent=15 // pred_fallthru
          _
        // Predicated region
        $region21: #{tpu_custom_call.1} parent=15 // pred_check
          %p163 = pneg %p87
        $region22: #{tpu_custom_call.1} parent=15 // pred_check_branch
          %165 = sbr.rel (%p163) target = $region24
        $region23: #{tpu_custom_call.1} parent=15 // pred_region
          %s166 = sand.u32 %s77, 1
          %s167 = scalar_lea.sflag [#allocation6], %s166
          %s168 = sand.u32 %s77, 1
          %s169 = smul.addr %s168, 16
          %s170 = scalar_lea.vmem [#allocation5], %s169
          %s171 = sadd.s32 %s24, %s25
          %p172 = scmp.lt.s32.totalorder %s171, 0
          %s173 = scalar_select %p172, %s171, 0
          %s174 = smul.u32 2, %s173
          %176 = vsyncadd %s167, 0
          %s177 = smul.addr %s174, 8
          %s178 = scalar_lea.hbm %s1, %s177
          %s179 = sshll.u32 %s178, 4
          %s180 = int_to_ptr.hbm [resolvable:$true] %s179
          %s181 = sshll.u32 %s170, 4
          %s182 = int_to_ptr.vmem [resolvable:$true] %s181
          %187 = dma.hbm_to_vmem [thread:$0]  %s180, 256, %s182, %s167, 128, 128, 8
        $region24: #{tpu_custom_call.1} parent=15 // pred_fallthru
          _
      $region16: #{tpu_custom_call.1} parent=5 // pred_fallthru
        _
      %p188 = scmp.le.s32.totalorder 1, %s17
      %p189 = scmp.lt.s32.totalorder %s17, 3
      %p190 = pnand %p188, %p189
      %p191 = pneg %p190
      // Predicated region
      $region25: #{tpu_custom_call.1} parent=5 // pred_check
        _
      $region26: #{tpu_custom_call.1} parent=5 // pred_check_branch
        %193 = sbr.rel (%p190) target = $region28
      $region27: #{tpu_custom_call.1} parent=5 // pred_region
        %s194 = ssub.s32 %s17, 1
        %s195 = sand.u32 %s48, 1
        %s196 = scalar_lea.sflag [#allocation3], %s195
        %s197 = sand.u32 %s48, 1
        %s198 = smul.addr %s197, 16
        %s199 = scalar_lea.vmem [#allocation2], %s198
        // Predicated region
        $region29: #{tpu_custom_call.1} parent=27 // pred_check
          %p200 = pneg %p61
        $region30: #{tpu_custom_call.1} parent=27 // pred_check_branch
          %202 = sbr.rel (%p200) target = $region32
        $region31: #{tpu_custom_call.1} parent=27 // pred_region
          %204 = dma.done %s196, 256
        $region32: #{tpu_custom_call.1} parent=27 // pred_fallthru
          _
        %s205 = sand.u32 %s80, 1
        %s206 = scalar_lea.sflag [#allocation6], %s205
        %s207 = sand.u32 %s80, 1
        %s208 = smul.addr %s207, 16
        %s209 = scalar_lea.vmem [#allocation5], %s208
        // Predicated region
        $region33: #{tpu_custom_call.1} parent=27 // pred_check
          %p210 = pneg %p93
        $region34: #{tpu_custom_call.1} parent=27 // pred_check_branch
          %212 = sbr.rel (%p210) target = $region36
        $region35: #{tpu_custom_call.1} parent=27 // pred_region
          %214 = dma.done %s206, 256
        $region36: #{tpu_custom_call.1} parent=27 // pred_fallthru
          _
        %s215 = sand.u32 %s48, 1
        %s216 = scalar_lea.sflag [#allocation3], %s215
        %s217 = sand.u32 %s48, 1
        %s218 = smul.addr %s217, 16
        %s219 = scalar_lea.vmem [#allocation2], %s218
        %p220 = pneg %p61
        %p221 = pneg %p58
        %s222 = sand.u32 %s80, 1
        %s223 = scalar_lea.sflag [#allocation6], %s222
        %s224 = sand.u32 %s80, 1
        %s225 = smul.addr %s224, 16
        %s226 = scalar_lea.vmem [#allocation5], %s225
        %p227 = pneg %p93
        %p228 = pneg %p90
        %p229 = pneg %p119
        %p230 = pneg %p116
        %s231 = sand.u32 %s106, 1
        %s232 = scalar_lea.sflag [#allocation4], %s231
        %s233 = sand.u32 %s106, 1
        %s234 = smul.addr %s233, 8
        %s235 = scalar_lea.vmem [#allocation7], %s234
        %s236 = sadd.s32 %s26, %s27
        %p237 = scmp.lt.s32.totalorder %s236, 0
        %s238 = scalar_select %p237, %s236, 0
        %s239 = smul.u32 2, %s238
        %s240 = sadd.s32 %s26, %s27
        %p241 = scmp.lt.s32.totalorder %s240, 0
        %s242 = scalar_select %p241, %s240, 0
        %s243 = smul.u32 2, %s242
        %p244 = scmp.eq.s32.totalorder %s27, 0
        // Predicated region
        $region37: #{tpu_custom_call.1} parent=27 // pred_check
          %p245 = pneg %p244
        $region38: #{tpu_custom_call.1} parent=27 // pred_check_branch
          %247 = sbr.rel (%p245) target = $region40
        $region39: #{tpu_custom_call.1} parent=27 // pred_region
          %248 = vst [vmem:[%s235] sm:$0xff] 0.0
        $region40: #{tpu_custom_call.1} parent=27 // pred_fallthru
          _
        %v249 = vld [vmem:[%s209] sm:$0xff]
        %v250 = vld [vmem:[%s209 + $0x8] sm:$0xff]
        %v251 = vld [vmem:[%s199] sm:$0xff]
        %v252 = vld [vmem:[%s199 + $0x8] sm:$0xff]
        %v253 = vsub.f32 %v249, %v251
        %v254 = vsub.f32 %v250, %v252
        %s255 = sadd.s32 %s26, %s27
        %s256 = smul.u32 %s255, 16
        %v257 = vlaneseq
        %v258 = vshrl.u32 %v257, 7
        %v259 = vadd.s32 %v258, 8
        %v260 = vstv %s256
        %v261 = vadd.s32 %v260, %v258
        %v262 = vadd.s32 %v260, %v259
        %vm263 = vcmp.lt.s32.totalorder %v261, 16
        %vm264 = vcmp.lt.s32.totalorder %v262, 16
        %v265 = vsel %vm263, %v253, 0.0
        %v266 = vsel %vm264, %v254, 0.0
        %v267 = vld [vmem:[%s235] sm:$0xff]
        %v268 = vadd.f32 %v265, %v266
        %v269 = vadd.f32 %v267, %v268
        %270 = vst [vmem:[%s235] sm:$0xff] %v269
        %s271 = sand.u32 %s106, 1
        %s272 = scalar_lea.sflag [#allocation4], %s271
        %s273 = sand.u32 %s106, 1
        %s274 = smul.addr %s273, 8
        %s275 = scalar_lea.vmem [#allocation7], %s274
        // Predicated region
        $region41: #{tpu_custom_call.1} parent=27 // pred_check
          %p276 = pneg %p116
        $region42: #{tpu_custom_call.1} parent=27 // pred_check_branch
          %278 = sbr.rel (%p276) target = $region44
        $region43: #{tpu_custom_call.1} parent=27 // pred_region
          %280 = vsyncadd %s272, 0
          %s281 = smul.addr %s26, 8
          %s282 = scalar_lea.hbm %s2, %s281
          %s284 = sshll.u32 %s275, 4
          %s285 = int_to_ptr.vmem [resolvable:$true] %s284
          %s286 = sshll.u32 %s282, 4
          %s287 = int_to_ptr.hbm [resolvable:$true] %s286
          %289 = dma.vmem_to_hbm [thread:$0]  %s285, 128, %s287, %s272
        $region44: #{tpu_custom_call.1} parent=27 // pred_fallthru
          _
      $region28: #{tpu_custom_call.1} parent=5 // pred_fallthru
        _
      %p290 = scmp.le.s32.totalorder 2, %s17
      // Predicated region
      $region45: #{tpu_custom_call.1} parent=5 // pred_check
        %p291 = pneg %p290
      $region46: #{tpu_custom_call.1} parent=5 // pred_check_branch
        %293 = sbr.rel (%p291) target = $region48
      $region47: #{tpu_custom_call.1} parent=5 // pred_region
        %s294 = ssub.s32 %s17, 2
        // Predicated region
        $region49: #{tpu_custom_call.1} parent=47 // pred_check
          %p295 = pneg %p122
        $region50: #{tpu_custom_call.1} parent=47 // pred_check_branch
          %297 = sbr.rel (%p295) target = $region52
        $region51: #{tpu_custom_call.1} parent=47 // pred_region
          %s298 = sand.u32 %s107, 1
          %s299 = scalar_lea.sflag [#allocation4], %s298
          %s300 = sand.u32 %s107, 1
          %s301 = smul.addr %s300, 8
          %s302 = scalar_lea.vmem [#allocation7], %s301
          %304 = dma.done %s299, 128
        $region52: #{tpu_custom_call.1} parent=47 // pred_fallthru
          _
      $region48: #{tpu_custom_call.1} parent=5 // pred_fallthru
        _
    $region6: #{tpu_custom_call.1} parent=1 // loop_footer
      %s21 = sadd.s32 1, %s17
    $region7: #{tpu_custom_call.1} parent=1 // loop_footer_branch
      %16 = sbr.rel target = $region3
    $region8: #{tpu_custom_call.1} parent=1 // loop_exit
      _
    %305 = vsyncpa [#allocation3], 1
    %s306 = scalar_lea.sflag [#allocation3], 1
    %307 = vsyncpa %s306, 1
    %308 = vsyncpa [#allocation6], 1
    %s309 = scalar_lea.sflag [#allocation6], 1
    %310 = vsyncpa %s309, 1
    %311 = vsyncpa [#allocation4], 1
    %s312 = scalar_lea.sflag [#allocation4], 1
    %313 = vsyncpa %s312, 1

</llo_original>
